<compile_context>
chip_gen: v7x
topology: tpu7x:2x2x1
jax: 0.10.0
libtpu: 0.0.40
codegen_flags: <defaults>
</compile_context>

<pallas_src>
import functools

import jax
import jax.numpy as jnp
from jax import lax
from jax.experimental import pallas as pl
from jax.experimental.pallas import tpu as pltpu


def _vmem_capacity_bytes():
    """Per-core VMEM capacity; conservative fallback (v7x per-TC = 64 MiB)."""
    try:
        return int(pltpu.get_tpu_info().vmem_capacity_bytes)
    except Exception:
        return 64 * 1024 * 1024


def _choose_tile_t(t, d, c, in_itemsize, requested, vmem_cap):
    """Largest time tile whose double-buffered streamed blocks fit ~35% of
    VMEM, rounded for (8,128) second-minor tiling / MXU M-dim fill."""
    if requested is None:
        budget = int(vmem_cap * 0.35)
        per_row = 2 * (d + c) * in_itemsize      # 2 pipeline buffers x (feats+preds)
        requested = max(8, budget // max(per_row, 1))
    requested = int(requested)
    if requested >= t or t <= 8:
        return t
    if requested >= 512:
        return (requested // 256) * 256          # fill 256-wide MXU M (v6e/v7x)
    return max(8, (requested // 8) * 8)


# ---------------------------------------------------------------------------
# Fused kernel body: one (tile_t, D)/(tile_t, C) block per (batch, time-tile).
#   CenterLoss: clip(||f_i - center[argmax_i]||^2, 1e-12, 1e12), summed.
#   ACELoss   : softmax over classes, summed over time (normalized in wrapper).
# Outputs act as resident accumulators across the "arbitrary" T axis.
# ---------------------------------------------------------------------------
def _combined_loss_kernel(feats_ref, preds_ref, centers_t_ref, sq_c_ref,
                          center_out_ref, agg_out_ref, *,
                          rem, mxu_dtype, exact_argmax):
    i = pl.program_id(1)
    nt = pl.num_programs(1)

    @pl.when(i == 0)
    def _():
        center_out_ref[...] = jnp.zeros_like(center_out_ref)
        agg_out_ref[...] = jnp.zeros_like(agg_out_ref)

    feats_in = feats_ref[0]                        # (TT, D), streamed dtype
    preds = preds_ref[0].astype(jnp.float32)       # (TT, C), f32 elementwise
    feats = feats_in.astype(jnp.float32)
    tt, _ = feats.shape
    c = preds.shape[-1]

    def accumulate(mask_col):
        # ---------- ACE: softmax over classes, sum over time ----------------
        mx = jnp.max(preds, axis=-1, keepdims=True)            # (TT, 1)
        e = jnp.exp(preds - mx)
        z = jnp.sum(e, axis=-1, keepdims=True)
        sm = e * pl.reciprocal(z, approx=True)                 # recip on EUP

        # ---------- CenterLoss: select-before-clip, one MXU matmul ----------
        if exact_argmax:
            col = lax.broadcasted_iota(jnp.int32, (tt, c), 1)
            idx = jnp.min(jnp.where(preds == mx, col, c), axis=-1, keepdims=True)
            onehot = (col == idx).astype(jnp.float32)
        else:
            # exact-float ties select all maxima (vanishingly rare for logits)
            onehot = (preds == mx).astype(jnp.float32)

        dot = jnp.dot(feats_in.astype(mxu_dtype), centers_t_ref[...],
                      preferred_element_type=jnp.float32)       # (TT, C)
        sq_f = jnp.sum(feats * feats, axis=-1, keepdims=True)   # (TT, 1)
        sel = jnp.sum((sq_c_ref[...] - 2.0 * dot) * onehot,
                      axis=-1, keepdims=True)                   # (TT, 1)
        dist_row = jnp.clip(sq_f + sel, 1e-12, 1e12)            # (TT, 1)

        if mask_col is not None:
            # where (not multiply) so garbage NaN/inf in OOB rows never leaks
            sm = jnp.where(mask_col, sm, 0.0)
            dist_row = jnp.where(mask_col, dist_row, 0.0)

        agg_out_ref[...] += jnp.sum(sm, axis=0, keepdims=True)[None]   # (1,1,C)
        center_out_ref[...] += jnp.sum(dist_row)                # scalar bcast

    if rem == 0:
        accumulate(None)
    else:
        @pl.when(i < nt - 1)
        def _():
            accumulate(None)                                    # no mask cost

        @pl.when(i == nt - 1)
        def _():
            t_idx = lax.broadcasted_iota(jnp.int32, (tt, 1), 0)
            accumulate(t_idx < rem)                             # (tt,1) column


def combined_center_ace_loss(features, predicts, centers, target, *,
                             tile_t=None, use_bf16_inputs=True,
                             use_bf16_mxu=True, exact_argmax=False):
    """Fused CenterLoss + ACELoss.

    features: (B, T, D)  predicts: (B, T, C)  centers: (C, D)  target: (B, C)
    Grid = (B "parallel", cdiv(T, tile_t) "arbitrary"); per-batch partial
    outputs are finalized (log / scaling) in plain JAX.
    """
    b, t, d = features.shape
    c = predicts.shape[-1]
    assert centers.shape == (c, d)
    assert target.shape == (b, c)

    stream_dtype = jnp.bfloat16 if use_bf16_inputs else jnp.float32
    mxu_dtype = jnp.bfloat16 if use_bf16_mxu else jnp.float32
    in_itemsize = jnp.dtype(stream_dtype).itemsize
    vmem_cap = _vmem_capacity_bytes()

    tile_t = _choose_tile_t(t, d, c, in_itemsize, tile_t, vmem_cap)
    nt = pl.cdiv(t, tile_t)
    rem = t % tile_t

    feats_in = features.astype(stream_dtype)
    preds_in = predicts.astype(stream_dtype)
    # Hoisted, grid-invariant centers data (resident in VMEM across the grid).
    centers_t = jnp.transpose(centers).astype(mxu_dtype)                  # (D, C)
    sq_c = jnp.sum(centers.astype(jnp.float32) ** 2, axis=-1)[None, :]    # (1, C)

    # VMEM accounting: double-buffered streamed blocks + resident operands.
    streamed = 2 * tile_t * (d + c) * in_itemsize
    resident = 2 * (d * c * jnp.dtype(mxu_dtype).itemsize + c * 4
                    + 128 * 4 + c * 4)
    vmem_limit = min(int(vmem_cap * 0.85),
                     max(32 * 1024 * 1024,
                         streamed + resident + 16 * 1024 * 1024))

    kernel = functools.partial(_combined_loss_kernel, rem=rem,
                               mxu_dtype=mxu_dtype, exact_argmax=exact_argmax)

    center_partial, agg = pl.pallas_call(
        kernel,
        out_shape=(jax.ShapeDtypeStruct((b, 1, 128), jnp.float32),
                   jax.ShapeDtypeStruct((b, 1, c), jnp.float32)),
        grid_spec=pltpu.PrefetchScalarGridSpec(
            num_scalar_prefetch=0,
            grid=(b, nt),
            in_specs=[
                pl.BlockSpec((1, tile_t, d), lambda bb, i: (bb, i, 0)),  # feats
                pl.BlockSpec((1, tile_t, c), lambda bb, i: (bb, i, 0)),  # preds
                pl.BlockSpec((d, c), lambda bb, i: (0, 0)),              # centers^T
                pl.BlockSpec((1, c), lambda bb, i: (0, 0)),              # ||c||^2
            ],
            out_specs=[
                pl.BlockSpec((1, 1, 128), lambda bb, i: (bb, 0, 0)),  # center part.
                pl.BlockSpec((1, 1, c), lambda bb, i: (bb, 0, 0)),    # softmax sum
            ],
        ),
        compiler_params=pltpu.CompilerParams(
            dimension_semantics=("parallel", "arbitrary"),
            vmem_limit_bytes=int(vmem_limit)),
    )(feats_in, preds_in, centers_t, sq_c)

    # Tiny finalize in plain JAX (per review): log, dot with target, scaling.
    loss_center = jnp.sum(center_partial[:, 0, 0]) * (1.0 / float(b * t))
    agg_bc = agg[:, 0, :] * (1.0 / float(t))                     # (B, C)
    # NOTE: reference takes log(agg) with no epsilon; softmax time-averages are
    # strictly positive so this is finite (kept for semantic parity).
    loss_ace = -jnp.sum(target * jnp.log(agg_bc)) * (1.0 / float(b))
    return loss_center, loss_ace


# ---------------------------------------------------------------------------
# CombinedLoss: mirrors the torchocr module's forward combining logic.
# ---------------------------------------------------------------------------
class CombinedLoss:
    def __init__(self, num_classes, feat_dim, key, tile_t=None):
        # combine_list = {'CenterLoss': {'weight': 0.05, num_classes, feat_dim},
        #                 'ACELoss':    {'weight': 0.1}}
        self.loss_weight = [0.05, 0.1]
        self.tile_t = tile_t
        # CenterLoss learnable centers, deterministic synthetic init.
        self.centers = jax.random.normal(key, (num_classes, feat_dim),
                                         jnp.float32)

    def forward(self, input, batch, **kwargs):
        features, predicts = input                       # (B,T,D), (B,T,C)
        b, t, _ = features.shape

        # ACELoss target prep (glue): counts[:, 0] = T - length ; counts /= T
        lengths = batch[2].astype(jnp.float32)           # (B,)
        counts = batch[3].astype(jnp.float32)            # (B, C)
        counts = counts.at[:, 0].set(float(t) - lengths)
        target = counts / float(t)

        loss_center, loss_ace = combined_center_ace_loss(
            features, predicts, self.centers, target, tile_t=self.tile_t)
        sub_losses = [{'loss_center': loss_center}, {'loss_ace': loss_ace}]

        loss_dict = {}
        loss_all = 0.0
        for idx, loss in enumerate(sub_losses):
            weight = self.loss_weight[idx]
            loss = {key: loss[key] * weight for key in loss}
            if 'loss' in loss:
                loss_all = loss_all + loss['loss']
            else:
                # reference: torch.add(list(loss.values())) -> intended sum
                loss_all = loss_all + sum(loss.values())
            loss_dict.update(loss)
        loss_dict['loss'] = loss_all
        return loss_dict


if __name__ == "__main__":
    key = jax.random.PRNGKey(0)
    kf, kp, kl, klen, kc = jax.random.split(key, 5)

    # Small shapes; T=24 with tile_t=16 exercises the parallel-B axis,
    # multi-tile reduction, and the last-tile-only masking path.
    B, T, C, D = 2, 24, 128, 128         # batch, seq, num_classes, feat_dim
    features = jax.random.normal(kf, (B, T, D), jnp.float32)
    predicts = jax.random.normal(kp, (B, T, C), jnp.float32)

    labels = jax.random.randint(kl, (B, T), 1, C)        # batch[1]
    lengths = jax.random.randint(klen, (B,), 1, T + 1)   # batch[2]
    valid = (jnp.arange(T)[None, :] < lengths[:, None]).astype(jnp.float32)
    counts = jnp.sum(jax.nn.one_hot(labels, C) * valid[:, :, None], axis=1)
    batch = [None, labels, lengths, counts]              # batch[3] = counts

    loss_mod = CombinedLoss(num_classes=C, feat_dim=D, key=kc, tile_t=16)
    out = loss_mod.forward((features, predicts), batch)
    jax.block_until_ready(out['loss'])
    print("KERNEL_OK")
</pallas_src>

<mosaic_0001>
module attributes {stable_mosaic.version = 11 : i64} {
  func.func @_combined_loss_kernel(%arg0: i32, %arg1: i32, %arg2: memref<1x16x128xbf16, #tpu.memory_space<vmem>>, %arg3: memref<1x16x128xbf16, #tpu.memory_space<vmem>>, %arg4: memref<128x128xbf16, #tpu.memory_space<vmem>>, %arg5: memref<1x128xf32, #tpu.memory_space<vmem>>, %arg6: memref<1x1x128xf32, #tpu.memory_space<vmem>>, %arg7: memref<1x1x128xf32, #tpu.memory_space<vmem>>) attributes {dimension_semantics = [#tpu.dimension_semantics<parallel>, #tpu.dimension_semantics<arbitrary>], iteration_bounds = array<i64: 2, 2>, scalar_prefetch = 0 : i64, scratch_operands = 0 : i64, tpu.core_type = #tpu.core_type<tc>, window_params = [{transform_indices = @transform_0, window_bounds = array<i64: 1, 16, 128>}, {transform_indices = @transform_1, window_bounds = array<i64: 1, 16, 128>}, {pipeline_mode = #tpu.pipeline_mode<synchronous>, transform_indices = @transform_2, window_bounds = array<i64: 128, 128>}, {pipeline_mode = #tpu.pipeline_mode<synchronous>, transform_indices = @transform_3, window_bounds = array<i64: 1, 128>}, {transform_indices = @transform_4, window_bounds = array<i64: 1, 1, 128>}, {transform_indices = @transform_5, window_bounds = array<i64: 1, 1, 128>}]} {
    %c0_i32 = arith.constant 0 : i32
    %0 = arith.cmpi eq, %arg1, %c0_i32 : i32
    %1 = arith.extui %0 : i1 to i32
    %c0_i32_0 = arith.constant 0 : i32
    %2 = arith.cmpi ne, %1, %c0_i32_0 : i32
    scf.if %2 {
      %cst = arith.constant 0.000000e+00 : f32
      %15 = vector.broadcast %cst : f32 to vector<1x1x128xf32>
      %c0_9 = arith.constant 0 : index
      %c0_10 = arith.constant 0 : index
      %c0_11 = arith.constant 0 : index
      %16 = vector.load %arg6[%c0_9, %c0_10, %c0_11] : memref<1x1x128xf32, #tpu.memory_space<vmem>>, vector<1x1x128xf32>
      tpu.vector_store %arg6[%c0_9, %c0_10, %c0_11], %15 {strides = array<i32>} : memref<1x1x128xf32, #tpu.memory_space<vmem>>, vector<1x1x128xf32>,
      %cst_12 = arith.constant 0.000000e+00 : f32
      %17 = vector.broadcast %cst_12 : f32 to vector<1x1x128xf32>
      %c0_13 = arith.constant 0 : index
      %c0_14 = arith.constant 0 : index
      %c0_15 = arith.constant 0 : index
      %18 = vector.load %arg7[%c0_13, %c0_14, %c0_15] : memref<1x1x128xf32, #tpu.memory_space<vmem>>, vector<1x1x128xf32>
      tpu.vector_store %arg7[%c0_13, %c0_14, %c0_15], %17 {strides = array<i32>} : memref<1x1x128xf32, #tpu.memory_space<vmem>>, vector<1x1x128xf32>,
    } else {
    }
    %c0 = arith.constant 0 : index
    %c0_1 = arith.constant 0 : index
    %c0_2 = arith.constant 0 : index
    %3 = vector.load %arg2[%c0, %c0_1, %c0_2] : memref<1x16x128xbf16, #tpu.memory_space<vmem>>, vector<1x16x128xbf16>
    %4 = vector.shape_cast %3 : vector<1x16x128xbf16> to vector<16x128xbf16>
    %c0_3 = arith.constant 0 : index
    %c0_4 = arith.constant 0 : index
    %c0_5 = arith.constant 0 : index
    %5 = vector.load %arg3[%c0_3, %c0_4, %c0_5] : memref<1x16x128xbf16, #tpu.memory_space<vmem>>, vector<1x16x128xbf16>
    %6 = vector.shape_cast %5 : vector<1x16x128xbf16> to vector<16x128xbf16>
    %7 = arith.extf %6 : vector<16x128xbf16> to vector<16x128xf32>
    %8 = arith.extf %4 : vector<16x128xbf16> to vector<16x128xf32>
    %c1_i32 = arith.constant 1 : i32
    %9 = arith.cmpi slt, %arg1, %c1_i32 : i32
    %10 = arith.extui %9 : i1 to i32
    %c0_i32_6 = arith.constant 0 : i32
    %11 = arith.cmpi ne, %10, %c0_i32_6 : i32
    scf.if %11 {
      %cst = arith.constant dense<0xFF800000> : vector<16xf32>
      %15 = vector.multi_reduction <maximumf>, %7, %cst [1] : vector<16x128xf32> to vector<16xf32>
      %16 = vector.shape_cast %15 : vector<16xf32> to vector<16x1xf32>
      %17 = vector.broadcast %16 : vector<16x1xf32> to vector<16x128xf32>
      %18 = arith.subf %7, %17 : vector<16x128xf32>
      %19 = math.exp %18 : vector<16x128xf32>
      %cst_9 = arith.constant dense<0.000000e+00> : vector<16xf32>
      %20 = vector.multi_reduction <add>, %19, %cst_9 [1] : vector<16x128xf32> to vector<16xf32>
      %21 = vector.shape_cast %20 : vector<16xf32> to vector<16x1xf32>
      %22 = tpu.reciprocal %21 {approx = true} : vector<16x1xf32> -> vector<16x1xf32>
      %23 = vector.broadcast %22 : vector<16x1xf32> to vector<16x128xf32>
      %24 = arith.mulf %19, %23 : vector<16x128xf32>
      %25 = vector.broadcast %16 : vector<16x1xf32> to vector<16x128xf32>
      %26 = arith.cmpf oeq, %7, %25 : vector<16x128xf32>
      %27 = arith.extui %26 : vector<16x128xi1> to vector<16x128xi32>
      %28 = arith.sitofp %27 : vector<16x128xi32> to vector<16x128xf32>
      %c0_10 = arith.constant 0 : index
      %c0_11 = arith.constant 0 : index
      %29 = vector.load %arg4[%c0_10, %c0_11] : memref<128x128xbf16, #tpu.memory_space<vmem>>, vector<128x128xbf16>
      %cst_12 = arith.constant dense<0.000000e+00> : vector<16x128xf32>
      %30 = tpu.matmul %4, %29, %cst_12 {dimension_numbers = #tpu.dot_dimension_numbers<[1], [0], [0], [1], [0, 0, 1, 1], [], []>} : vector<16x128xbf16>, vector<128x128xbf16>, vector<16x128xf32> -> vector<16x128xf32>
      %31 = arith.mulf %8, %8 : vector<16x128xf32>
      %cst_13 = arith.constant dense<0.000000e+00> : vector<16xf32>
      %32 = vector.multi_reduction <add>, %31, %cst_13 [1] : vector<16x128xf32> to vector<16xf32>
      %33 = vector.shape_cast %32 : vector<16xf32> to vector<16x1xf32>
      %c0_14 = arith.constant 0 : index
      %c0_15 = arith.constant 0 : index
      %34 = vector.load %arg5[%c0_14, %c0_15] : memref<1x128xf32, #tpu.memory_space<vmem>>, vector<1x128xf32>
      %cst_16 = arith.constant 2.000000e+00 : f32
      %35 = vector.broadcast %cst_16 : f32 to vector<16x128xf32>
      %36 = arith.mulf %35, %30 : vector<16x128xf32>
      %37 = vector.broadcast %34 : vector<1x128xf32> to vector<16x128xf32>
      %38 = arith.subf %37, %36 : vector<16x128xf32>
      %39 = arith.mulf %38, %28 : vector<16x128xf32>
      %cst_17 = arith.constant dense<0.000000e+00> : vector<16xf32>
      %40 = vector.multi_reduction <add>, %39, %cst_17 [1] : vector<16x128xf32> to vector<16xf32>
      %41 = vector.shape_cast %40 : vector<16xf32> to vector<16x1xf32>
      %42 = arith.addf %33, %41 : vector<16x1xf32>
      %cst_18 = arith.constant 9.99999996E-13 : f32
      %cst_19 = arith.constant 9.99999995E+11 : f32
      %43 = vector.broadcast %cst_18 : f32 to vector<16x1xf32>
      %44 = arith.maximumf %43, %42 : vector<16x1xf32>
      %45 = vector.broadcast %cst_19 : f32 to vector<16x1xf32>
      %46 = arith.minimumf %45, %44 : vector<16x1xf32>
      %c0_20 = arith.constant 0 : index
      %c0_21 = arith.constant 0 : index
      %c0_22 = arith.constant 0 : index
      %47 = vector.load %arg7[%c0_20, %c0_21, %c0_22] : memref<1x1x128xf32, #tpu.memory_space<vmem>>, vector<1x1x128xf32>
      %cst_23 = arith.constant dense<0.000000e+00> : vector<128xf32>
      %48 = vector.multi_reduction <add>, %24, %cst_23 [0] : vector<16x128xf32> to vector<128xf32>
      %49 = vector.shape_cast %48 : vector<128xf32> to vector<1x128xf32>
      %50 = vector.shape_cast %49 : vector<1x128xf32> to vector<1x1x128xf32>
      %51 = arith.addf %47, %50 : vector<1x1x128xf32>
      %c0_24 = arith.constant 0 : index
      %c0_25 = arith.constant 0 : index
      %c0_26 = arith.constant 0 : index
      %52 = vector.load %arg7[%c0_24, %c0_25, %c0_26] : memref<1x1x128xf32, #tpu.memory_space<vmem>>, vector<1x1x128xf32>
      tpu.vector_store %arg7[%c0_24, %c0_25, %c0_26], %51 {strides = array<i32>} : memref<1x1x128xf32, #tpu.memory_space<vmem>>, vector<1x1x128xf32>,
      %c0_27 = arith.constant 0 : index
      %c0_28 = arith.constant 0 : index
      %c0_29 = arith.constant 0 : index
      %53 = vector.load %arg6[%c0_27, %c0_28, %c0_29] : memref<1x1x128xf32, #tpu.memory_space<vmem>>, vector<1x1x128xf32>
      %54 = vector.shape_cast %46 : vector<16x1xf32> to vector<1x16x1xf32>
      %cst_30 = arith.constant dense<0.000000e+00> : vector<1xf32>
      %55 = vector.multi_reduction <add>, %54, %cst_30 [1, 2] : vector<1x16x1xf32> to vector<1xf32>
      %56 = vector.shape_cast %55 : vector<1xf32> to vector<1x1x1xf32>
      %57 = vector.extract %56[0, 0, 0] : f32 from vector<1x1x1xf32>
      %58 = vector.broadcast %57 : f32 to vector<1x1x128xf32>
      %59 = arith.addf %53, %58 : vector<1x1x128xf32>
      %c0_31 = arith.constant 0 : index
      %c0_32 = arith.constant 0 : index
      %c0_33 = arith.constant 0 : index
      %60 = vector.load %arg6[%c0_31, %c0_32, %c0_33] : memref<1x1x128xf32, #tpu.memory_space<vmem>>, vector<1x1x128xf32>
      tpu.vector_store %arg6[%c0_31, %c0_32, %c0_33], %59 {strides = array<i32>} : memref<1x1x128xf32, #tpu.memory_space<vmem>>, vector<1x1x128xf32>,
    } else {
    }
    %c1_i32_7 = arith.constant 1 : i32
    %12 = arith.cmpi eq, %arg1, %c1_i32_7 : i32
    %13 = arith.extui %12 : i1 to i32
    %c0_i32_8 = arith.constant 0 : i32
    %14 = arith.cmpi ne, %13, %c0_i32_8 : i32
    scf.if %14 {
      %15 = tpu.iota {dimensions = array<i32: 0>} : vector<16x1xi32>
      %c8_i32 = arith.constant 8 : i32
      %16 = vector.broadcast %c8_i32 : i32 to vector<16x1xi32>
      %17 = arith.cmpi slt, %15, %16 : vector<16x1xi32>
      %cst = arith.constant dense<0xFF800000> : vector<16xf32>
      %18 = vector.multi_reduction <maximumf>, %7, %cst [1] : vector<16x128xf32> to vector<16xf32>
      %19 = vector.shape_cast %18 : vector<16xf32> to vector<16x1xf32>
      %20 = vector.broadcast %19 : vector<16x1xf32> to vector<16x128xf32>
      %21 = arith.subf %7, %20 : vector<16x128xf32>
      %22 = math.exp %21 : vector<16x128xf32>
      %cst_9 = arith.constant dense<0.000000e+00> : vector<16xf32>
      %23 = vector.multi_reduction <add>, %22, %cst_9 [1] : vector<16x128xf32> to vector<16xf32>
      %24 = vector.shape_cast %23 : vector<16xf32> to vector<16x1xf32>
      %25 = tpu.reciprocal %24 {approx = true} : vector<16x1xf32> -> vector<16x1xf32>
      %26 = vector.broadcast %25 : vector<16x1xf32> to vector<16x128xf32>
      %27 = arith.mulf %22, %26 : vector<16x128xf32>
      %28 = vector.broadcast %19 : vector<16x1xf32> to vector<16x128xf32>
      %29 = arith.cmpf oeq, %7, %28 : vector<16x128xf32>
      %30 = arith.extui %29 : vector<16x128xi1> to vector<16x128xi32>
      %31 = arith.sitofp %30 : vector<16x128xi32> to vector<16x128xf32>
      %c0_10 = arith.constant 0 : index
      %c0_11 = arith.constant 0 : index
      %32 = vector.load %arg4[%c0_10, %c0_11] : memref<128x128xbf16, #tpu.memory_space<vmem>>, vector<128x128xbf16>
      %cst_12 = arith.constant dense<0.000000e+00> : vector<16x128xf32>
      %33 = tpu.matmul %4, %32, %cst_12 {dimension_numbers = #tpu.dot_dimension_numbers<[1], [0], [0], [1], [0, 0, 1, 1], [], []>} : vector<16x128xbf16>, vector<128x128xbf16>, vector<16x128xf32> -> vector<16x128xf32>
      %34 = arith.mulf %8, %8 : vector<16x128xf32>
      %cst_13 = arith.constant dense<0.000000e+00> : vector<16xf32>
      %35 = vector.multi_reduction <add>, %34, %cst_13 [1] : vector<16x128xf32> to vector<16xf32>
      %36 = vector.shape_cast %35 : vector<16xf32> to vector<16x1xf32>
      %c0_14 = arith.constant 0 : index
      %c0_15 = arith.constant 0 : index
      %37 = vector.load %arg5[%c0_14, %c0_15] : memref<1x128xf32, #tpu.memory_space<vmem>>, vector<1x128xf32>
      %cst_16 = arith.constant 2.000000e+00 : f32
      %38 = vector.broadcast %cst_16 : f32 to vector<16x128xf32>
      %39 = arith.mulf %38, %33 : vector<16x128xf32>
      %40 = vector.broadcast %37 : vector<1x128xf32> to vector<16x128xf32>
      %41 = arith.subf %40, %39 : vector<16x128xf32>
      %42 = arith.mulf %41, %31 : vector<16x128xf32>
      %cst_17 = arith.constant dense<0.000000e+00> : vector<16xf32>
      %43 = vector.multi_reduction <add>, %42, %cst_17 [1] : vector<16x128xf32> to vector<16xf32>
      %44 = vector.shape_cast %43 : vector<16xf32> to vector<16x1xf32>
      %45 = arith.addf %36, %44 : vector<16x1xf32>
      %cst_18 = arith.constant 9.99999996E-13 : f32
      %cst_19 = arith.constant 9.99999995E+11 : f32
      %46 = vector.broadcast %cst_18 : f32 to vector<16x1xf32>
      %47 = arith.maximumf %46, %45 : vector<16x1xf32>
      %48 = vector.broadcast %cst_19 : f32 to vector<16x1xf32>
      %49 = arith.minimumf %48, %47 : vector<16x1xf32>
      %cst_20 = arith.constant 0.000000e+00 : f32
      %50 = vector.shape_cast %17 : vector<16x1xi1> to vector<16x1xi1>
      %51 = vector.broadcast %50 : vector<16x1xi1> to vector<16x128xi1>
      %52 = vector.broadcast %cst_20 : f32 to vector<16x128xf32>
      %53 = arith.select %51, %27, %52 : vector<16x128xi1>, vector<16x128xf32>
      %cst_21 = arith.constant 0.000000e+00 : f32
      %54 = vector.broadcast %cst_21 : f32 to vector<16x1xf32>
      %55 = arith.select %17, %49, %54 : vector<16x1xi1>, vector<16x1xf32>
      %c0_22 = arith.constant 0 : index
      %c0_23 = arith.constant 0 : index
      %c0_24 = arith.constant 0 : index
      %56 = vector.load %arg7[%c0_22, %c0_23, %c0_24] : memref<1x1x128xf32, #tpu.memory_space<vmem>>, vector<1x1x128xf32>
      %cst_25 = arith.constant dense<0.000000e+00> : vector<128xf32>
      %57 = vector.multi_reduction <add>, %53, %cst_25 [0] : vector<16x128xf32> to vector<128xf32>
      %58 = vector.shape_cast %57 : vector<128xf32> to vector<1x128xf32>
      %59 = vector.shape_cast %58 : vector<1x128xf32> to vector<1x1x128xf32>
      %60 = arith.addf %56, %59 : vector<1x1x128xf32>
      %c0_26 = arith.constant 0 : index
      %c0_27 = arith.constant 0 : index
      %c0_28 = arith.constant 0 : index
      %61 = vector.load %arg7[%c0_26, %c0_27, %c0_28] : memref<1x1x128xf32, #tpu.memory_space<vmem>>, vector<1x1x128xf32>
      tpu.vector_store %arg7[%c0_26, %c0_27, %c0_28], %60 {strides = array<i32>} : memref<1x1x128xf32, #tpu.memory_space<vmem>>, vector<1x1x128xf32>,
      %c0_29 = arith.constant 0 : index
      %c0_30 = arith.constant 0 : index
      %c0_31 = arith.constant 0 : index
      %62 = vector.load %arg6[%c0_29, %c0_30, %c0_31] : memref<1x1x128xf32, #tpu.memory_space<vmem>>, vector<1x1x128xf32>
      %63 = vector.shape_cast %55 : vector<16x1xf32> to vector<1x16x1xf32>
      %cst_32 = arith.constant dense<0.000000e+00> : vector<1xf32>
      %64 = vector.multi_reduction <add>, %63, %cst_32 [1, 2] : vector<1x16x1xf32> to vector<1xf32>
      %65 = vector.shape_cast %64 : vector<1xf32> to vector<1x1x1xf32>
      %66 = vector.extract %65[0, 0, 0] : f32 from vector<1x1x1xf32>
      %67 = vector.broadcast %66 : f32 to vector<1x1x128xf32>
      %68 = arith.addf %62, %67 : vector<1x1x128xf32>
      %c0_33 = arith.constant 0 : index
      %c0_34 = arith.constant 0 : index
      %c0_35 = arith.constant 0 : index
      %69 = vector.load %arg6[%c0_33, %c0_34, %c0_35] : memref<1x1x128xf32, #tpu.memory_space<vmem>>, vector<1x1x128xf32>
      tpu.vector_store %arg6[%c0_33, %c0_34, %c0_35], %68 {strides = array<i32>} : memref<1x1x128xf32, #tpu.memory_space<vmem>>, vector<1x1x128xf32>,
    } else {
    }
    return
  }
  func.func @transform_0(%arg0: i32, %arg1: i32) -> (i32, i32, i32) {
    %c0_i32 = arith.constant 0 : i32
    %c0_i32_0 = arith.constant 0 : i32
    return %arg0, %arg1, %c0_i32 : i32, i32, i32
  }
  func.func @transform_1(%arg0: i32, %arg1: i32) -> (i32, i32, i32) {
    %c0_i32 = arith.constant 0 : i32
    %c0_i32_0 = arith.constant 0 : i32
    return %arg0, %arg1, %c0_i32 : i32, i32, i32
  }
  func.func @transform_2(%arg0: i32, %arg1: i32) -> (i32, i32) {
    %c0_i32 = arith.constant 0 : i32
    %c0_i32_0 = arith.constant 0 : i32
    %c0_i32_1 = arith.constant 0 : i32
    return %c0_i32, %c0_i32_0 : i32, i32
  }
  func.func @transform_3(%arg0: i32, %arg1: i32) -> (i32, i32) {
    %c0_i32 = arith.constant 0 : i32
    %c0_i32_0 = arith.constant 0 : i32
    %c0_i32_1 = arith.constant 0 : i32
    return %c0_i32, %c0_i32_0 : i32, i32
  }
  func.func @transform_4(%arg0: i32, %arg1: i32) -> (i32, i32, i32) {
    %c0_i32 = arith.constant 0 : i32
    %c0_i32_0 = arith.constant 0 : i32
    %c0_i32_1 = arith.constant 0 : i32
    return %arg0, %c0_i32, %c0_i32_0 : i32, i32, i32
  }
  func.func @transform_5(%arg0: i32, %arg1: i32) -> (i32, i32, i32) {
    %c0_i32 = arith.constant 0 : i32
    %c0_i32_0 = arith.constant 0 : i32
    %c0_i32_1 = arith.constant 0 : i32
    return %arg0, %c0_i32, %c0_i32_0 : i32, i32, i32
  }
}

</mosaic_0001>

<llo_original>
// kernel: tpu_custom_call.1
$region0: #{tpu_custom_call.1}
  #allocation0 [shape = 'u32[]', space=smem, size = 0x4, offset = 0x4, fixed_abs, tag = 'smem constant byte address 0x4 - core index']
  #allocation1 [shape = 'u32[144,128]{1,0:T(1,128)}', space=vmem, size = 0x12000, scoped, tag = 'internal scratch']
  %s0 = inlined_call_operand.hbm [shape: bf16[2,24,128], index: 0, kind: input, shape index: {}]
  %s1 = inlined_call_operand.hbm [shape: bf16[2,24,128], index: 1, kind: input, shape index: {}]
  %s2 = inlined_call_operand.hbm [shape: bf16[128,128], index: 2, kind: input, shape index: {}]
  %s3 = inlined_call_operand.vmem [shape: f32[1,128], index: 3, kind: input, shape index: {}]
  %s4 = inlined_call_operand.hbm [shape: f32[2,1,128], index: 4, kind: output, shape index: {0}]
  %s5 = inlined_call_operand.hbm [shape: f32[2,1,128], index: 5, kind: output, shape index: {1}]
  %6 = xla_tuple %s4, %s5
  %s7 = sld [smem:[#allocation0]]
  $region81: #{tpu_custom_call.1} parent=0
    _
  %s9 = ssub.s32 1, %s7
  %s10 = scalar_select 0, %s9, %s7
  $region1: #{tpu_custom_call.1} parent=0
    #allocation2 [shape = 'u8[8192]{0}', space=vmem, size = 0x2000, scoped, tag = 'input window, operand 0']
    #allocation3 [shape = 's32[2]{0}', space=sflag, size = 0x8, scoped, tag = 'scoped memory for tpu_custom_call.1']
    #allocation4 [shape = 's32[2]{0}', space=sflag, size = 0x8, scoped, tag = 'scoped memory for tpu_custom_call.1']
    #allocation5 [shape = 'u8[8192]{0}', space=vmem, size = 0x2000, scoped, tag = 'input window, operand 1']
    #allocation6 [shape = 's32[2]{0}', space=sflag, size = 0x8, scoped, tag = 'scoped memory for tpu_custom_call.1']
    #allocation7 [shape = 'u8[32768]{0}', space=vmem, size = 0x8000, scoped, tag = 'input window, operand 2, single buffered']
    #allocation8 [shape = 'u8[1024]{0}', space=vmem, size = 0x400, scoped, tag = 'output window, operand 0']
    #allocation9 [shape = 'u8[1024]{0}', space=vmem, size = 0x400, scoped, tag = 'output window, operand 1']
    #allocation10 [shape = 's32[2]{0}', space=sflag, size = 0x8, scoped, tag = 'scoped memory for tpu_custom_call.1']
    %11 = vsyncpa [#allocation3], 0
    %s12 = scalar_lea.sflag [#allocation3], 1
    %13 = vsyncpa %s12, 0
    %14 = vsyncpa [#allocation6], 0
    %s15 = scalar_lea.sflag [#allocation6], 1
    %16 = vsyncpa %s15, 0
    %17 = vsyncpa [#allocation4], 0
    %s18 = scalar_lea.sflag [#allocation4], 1
    %19 = vsyncpa %s18, 0
    %20 = vsyncpa [#allocation10], 0
    %s21 = scalar_lea.sflag [#allocation10], 1
    %22 = vsyncpa %s21, 0
    loop: start=0, step=1, limit=6
    $region2: #{tpu_custom_call.1} parent=1 // loop_pre_header
      _
    $region3: #{tpu_custom_call.1} parent=1 // loop_header
      %s24 = sphi 0, %s28
      %p25 = scmp.ge.s32.totalorder %s24, 6
      %s31 = sphi 0, %s43
      %s32 = sphi 0, %s39
      %s33 = sphi 0, %s31
      %s34 = sphi 0, %s32
      %s35 = sphi 0, %s33
      %s36 = sphi 0, %s34
      %s48 = sphi 0, %s50
      %s51 = sphi 0, %s48
      %s52 = sphi 0, %s51
      %s68 = sphi 0, %s52
      %s76 = sphi 0, %s78
      %s79 = sphi 0, %s76
      %s80 = sphi 0, %s79
      %s96 = sphi 0, %s80
      %s100 = sphi 0, %s100
      %s102 = sphi 0, %s100
      %s103 = sphi 0, %s102
      %s117 = sphi 0, %s103
      %s121 = sphi 0, %s121
      %s123 = sphi 0, %s121
      %s124 = sphi 0, %s123
      %s138 = sphi 0, %s124
      %s144 = sphi 0, %s146
      %s147 = sphi 0, %s144
      %s148 = sphi 0, %s147
      %s164 = sphi 0, %s148
      %s170 = sphi 0, %s172
      %s173 = sphi 0, %s170
      %s174 = sphi 0, %s173
      %s190 = sphi 0, %s174
    $region4: #{tpu_custom_call.1} parent=1 // loop_header_branch
      %27 = sbr.rel (%p25) target = $region8
    $region5: #{tpu_custom_call.1} parent=1 // loop_body
      %s29 = ssub.s32 %s24, 1
      %s30 = ssub.s32 %s24, 2
      %s37 = sadd.s32 1, %s32
      %p38 = scmp.ge.s32.totalorder %s37, 2
      %s39 = scalar_select %p38, 0, %s37
      %s40 = sadd.s32 1, %s31
      %s41 = scalar_select %p38, %s40, %s31
      %p42 = scmp.ge.s32.totalorder %s41, 2
      %s43 = scalar_select %p42, 0, %s41
      %s44 = ssub.s32 %s31, %s43
      %s45 = ssub.s32 %s32, %s39
      %s46 = sor.u32 %s44, %s45
      %p47 = scmp.eq.s32.totalorder %s46, 0
      %s49 = sadd.s32 %s48, 1
      %s50 = scalar_select %p47, %s48, %s49
      %p53 = pneg %p47
      %p54 = scmp.eq.s32.totalorder %s24, 3
      %p55 = por %p53, %p54
      %p56 = scmp.ne.s32.totalorder %s48, %s51
      %p57 = scmp.eq.s32.totalorder %s24, 0
      %p58 = por %p56, %p57
      %p59 = scmp.ne.s32.totalorder %s48, %s51
      %p60 = scmp.eq.s32.totalorder %s29, 3
      %p61 = por %p59, %p60
      %p62 = scmp.ne.s32.totalorder %s51, %s52
      %p63 = scmp.eq.s32.totalorder %s29, 0
      %p64 = por %p62, %p63
      %p65 = scmp.ne.s32.totalorder %s51, %s52
      %p66 = scmp.eq.s32.totalorder %s30, 3
      %p67 = por %p65, %p66
      %p69 = scmp.ne.s32.totalorder %s52, %s68
      %p70 = scmp.eq.s32.totalorder %s30, 0
      %p71 = por %p69, %p70
      %s72 = ssub.s32 %s31, %s43
      %s73 = ssub.s32 %s32, %s39
      %s74 = sor.u32 %s72, %s73
      %p75 = scmp.eq.s32.totalorder %s74, 0
      %s77 = sadd.s32 %s76, 1
      %s78 = scalar_select %p75, %s76, %s77
      %p81 = pneg %p75
      %p82 = scmp.eq.s32.totalorder %s24, 3
      %p83 = por %p81, %p82
      %p84 = scmp.ne.s32.totalorder %s76, %s79
      %p85 = scmp.eq.s32.totalorder %s24, 0
      %p86 = por %p84, %p85
      %p87 = scmp.ne.s32.totalorder %s76, %s79
      %p88 = scmp.eq.s32.totalorder %s29, 3
      %p89 = por %p87, %p88
      %p90 = scmp.ne.s32.totalorder %s79, %s80
      %p91 = scmp.eq.s32.totalorder %s29, 0
      %p92 = por %p90, %p91
      %p93 = scmp.ne.s32.totalorder %s79, %s80
      %p94 = scmp.eq.s32.totalorder %s30, 3
      %p95 = por %p93, %p94
      %p97 = scmp.ne.s32.totalorder %s80, %s96
      %p98 = scmp.eq.s32.totalorder %s30, 0
      %p99 = por %p97, %p98
      %s101 = sadd.s32 %s100, 1
      %p104 = scmp.eq.s32.totalorder %s24, 3
      %p105 = scmp.ne.s32.totalorder %s100, %s102
      %p106 = scmp.eq.s32.totalorder %s24, 0
      %p107 = por %p105, %p106
      %p108 = scmp.ne.s32.totalorder %s100, %s102
      %p109 = scmp.eq.s32.totalorder %s29, 3
      %p110 = por %p108, %p109
      %p111 = scmp.ne.s32.totalorder %s102, %s103
      %p112 = scmp.eq.s32.totalorder %s29, 0
      %p113 = por %p111, %p112
      %p114 = scmp.ne.s32.totalorder %s102, %s103
      %p115 = scmp.eq.s32.totalorder %s30, 3
      %p116 = por %p114, %p115
      %p118 = scmp.ne.s32.totalorder %s103, %s117
      %p119 = scmp.eq.s32.totalorder %s30, 0
      %p120 = por %p118, %p119
      %s122 = sadd.s32 %s121, 1
      %p125 = scmp.eq.s32.totalorder %s24, 3
      %p126 = scmp.ne.s32.totalorder %s121, %s123
      %p127 = scmp.eq.s32.totalorder %s24, 0
      %p128 = por %p126, %p127
      %p129 = scmp.ne.s32.totalorder %s121, %s123
      %p130 = scmp.eq.s32.totalorder %s29, 3
      %p131 = por %p129, %p130
      %p132 = scmp.ne.s32.totalorder %s123, %s124
      %p133 = scmp.eq.s32.totalorder %s29, 0
      %p134 = por %p132, %p133
      %p135 = scmp.ne.s32.totalorder %s123, %s124
      %p136 = scmp.eq.s32.totalorder %s30, 3
      %p137 = por %p135, %p136
      %p139 = scmp.ne.s32.totalorder %s124, %s138
      %p140 = scmp.eq.s32.totalorder %s30, 0
      %p141 = por %p139, %p140
      %s142 = ssub.s32 %s31, %s43
      %p143 = scmp.eq.s32.totalorder %s142, 0
      %s145 = sadd.s32 %s144, 1
      %s146 = scalar_select %p143, %s144, %s145
      %p149 = pneg %p143
      %p150 = scmp.eq.s32.totalorder %s24, 3
      %p151 = por %p149, %p150
      %p152 = scmp.ne.s32.totalorder %s144, %s147
      %p153 = scmp.eq.s32.totalorder %s24, 0
      %p154 = por %p152, %p153
      %p155 = scmp.ne.s32.totalorder %s144, %s147
      %p156 = scmp.eq.s32.totalorder %s29, 3
      %p157 = por %p155, %p156
      %p158 = scmp.ne.s32.totalorder %s147, %s148
      %p159 = scmp.eq.s32.totalorder %s29, 0
      %p160 = por %p158, %p159
      %p161 = scmp.ne.s32.totalorder %s147, %s148
      %p162 = scmp.eq.s32.totalorder %s30, 3
      %p163 = por %p161, %p162
      %p165 = scmp.ne.s32.totalorder %s148, %s164
      %p166 = scmp.eq.s32.totalorder %s30, 0
      %p167 = por %p165, %p166
      %s168 = ssub.s32 %s31, %s43
      %p169 = scmp.eq.s32.totalorder %s168, 0
      %s171 = sadd.s32 %s170, 1
      %s172 = scalar_select %p169, %s170, %s171
      %p175 = pneg %p169
      %p176 = scmp.eq.s32.totalorder %s24, 3
      %p177 = por %p175, %p176
      %p178 = scmp.ne.s32.totalorder %s170, %s173
      %p179 = scmp.eq.s32.totalorder %s24, 0
      %p180 = por %p178, %p179
      %p181 = scmp.ne.s32.totalorder %s170, %s173
      %p182 = scmp.eq.s32.totalorder %s29, 3
      %p183 = por %p181, %p182
      %p184 = scmp.ne.s32.totalorder %s173, %s174
      %p185 = scmp.eq.s32.totalorder %s29, 0
      %p186 = por %p184, %p185
      %p187 = scmp.ne.s32.totalorder %s173, %s174
      %p188 = scmp.eq.s32.totalorder %s30, 3
      %p189 = por %p187, %p188
      %p191 = scmp.ne.s32.totalorder %s174, %s190
      %p192 = scmp.eq.s32.totalorder %s30, 0
      %p193 = por %p191, %p192
      %p194 = scmp.le.s32.totalorder 1, %s24
      %p195 = scmp.lt.s32.totalorder %s24, 5
      %p196 = pnand %p194, %p195
      %p197 = pneg %p196
      // Predicated region
      $region9: #{tpu_custom_call.1} parent=5 // pred_check
        _
      $region10: #{tpu_custom_call.1} parent=5 // pred_check_branch
        %199 = sbr.rel (%p196) target = $region12
      $region11: #{tpu_custom_call.1} parent=5 // pred_region
        %s200 = ssub.s32 %s24, 1
        // Predicated region
        $region13: #{tpu_custom_call.1} parent=11 // pred_check
          %p201 = pneg %p113
        $region14: #{tpu_custom_call.1} parent=11 // pred_check_branch
          %203 = sbr.rel (%p201) target = $region16
        $region15: #{tpu_custom_call.1} parent=11 // pred_region
          %s205 = ssub.s32 1024, 1024
          %206 = vsyncadd [#allocation6], %s205
          %s207 = sshll.u32 [#allocation7], 4
          %s208 = int_to_ptr.vmem [resolvable:$true] %s207
          %213 = dma.hbm_to_vmem [thread:$0]  %s2, 1024, %s208, [#allocation6], 64, 64, 4
        $region16: #{tpu_custom_call.1} parent=11 // pred_fallthru
          _
        // Predicated region
        $region17: #{tpu_custom_call.1} parent=11 // pred_check
          %p214 = pneg %p134
        $region18: #{tpu_custom_call.1} parent=11 // pred_check_branch
          %216 = sbr.rel (%p214) target = $region20
        $region19: #{tpu_custom_call.1} parent=11 // pred_region
          _
        $region20: #{tpu_custom_call.1} parent=11 // pred_fallthru
          _
      $region12: #{tpu_custom_call.1} parent=5 // pred_fallthru
        _
      %p217 = scmp.lt.s32.totalorder %s24, 4
      // Predicated region
      $region21: #{tpu_custom_call.1} parent=5 // pred_check
        %p218 = pneg %p217
      $region22: #{tpu_custom_call.1} parent=5 // pred_check_branch
        %220 = sbr.rel (%p218) target = $region24
      $region23: #{tpu_custom_call.1} parent=5 // pred_region
        // Predicated region
        $region25: #{tpu_custom_call.1} parent=23 // pred_check
          %p221 = pneg %p58
        $region26: #{tpu_custom_call.1} parent=23 // pred_check_branch
          %223 = sbr.rel (%p221) target = $region28
        $region27: #{tpu_custom_call.1} parent=23 // pred_region
          %s224 = sand.u32 %s48, 1
          %s225 = scalar_lea.sflag [#allocation3], %s224
          %s226 = sand.u32 %s48, 1
          %s227 = smul.addr %s226, 8
          %s228 = scalar_lea.vmem [#allocation2], %s227
          %s229 = smul.u32 2, %s32
          %s230 = ssub.s32 3, %s229
          %p231 = scmp.lt.s32.totalorder %s230, 2
          %s232 = scalar_select %p231, %s230, 2
          %s233 = smul.u32 64, %s232
          %s235 = ssub.s32 128, %s233
          %236 = vsyncadd %s225, %s235
          %p237 = scmp.ne.s32.totalorder 0, %s233
          %s238 = smul.addr %s31, 3
          %s239 = sadd.s32 %s229, %s238
          %s240 = smul.addr %s239, 64
          %s241 = scalar_lea.hbm %s0, %s240
          %s242 = smul.u32 4, %s232
          %s243 = sshll.u32 %s228, 4
          %s244 = int_to_ptr.vmem [resolvable:$true] %s243
          %s245 = sshll.u32 %s242, 4
          %249 = dma.hbm_to_vmem [thread:$0]  (%p237), %s241, %s245, %s244, %s225, 64, 64, 4
        $region28: #{tpu_custom_call.1} parent=23 // pred_fallthru
          _
        // Predicated region
        $region29: #{tpu_custom_call.1} parent=23 // pred_check
          %p250 = pneg %p86
        $region30: #{tpu_custom_call.1} parent=23 // pred_check_branch
          %252 = sbr.rel (%p250) target = $region32
        $region31: #{tpu_custom_call.1} parent=23 // pred_region
          %s253 = sand.u32 %s24, 1
          %s254 = scalar_lea.sflag [#allocation6], %s253
          %s255 = sand.u32 %s76, 1
          %s256 = smul.addr %s255, 8
          %s257 = scalar_lea.vmem [#allocation5], %s256
          %s258 = smul.u32 2, %s32
          %s259 = ssub.s32 3, %s258
          %p260 = scmp.lt.s32.totalorder %s259, 2
          %s261 = scalar_select %p260, %s259, 2
          %s262 = smul.u32 64, %s261
          %s264 = ssub.s32 128, %s262
          %265 = vsyncadd %s254, %s264
          %p266 = scmp.ne.s32.totalorder 0, %s262
          %s267 = smul.addr %s31, 3
          %s268 = sadd.s32 %s258, %s267
          %s269 = smul.addr %s268, 64
          %s270 = scalar_lea.hbm %s1, %s269
          %s271 = smul.u32 4, %s261
          %s272 = sshll.u32 %s257, 4
          %s273 = int_to_ptr.vmem [resolvable:$true] %s272
          %s274 = sshll.u32 %s271, 4
          %278 = dma.hbm_to_vmem [thread:$0]  (%p266), %s270, %s274, %s273, %s254, 64, 64, 4
        $region32: #{tpu_custom_call.1} parent=23 // pred_fallthru
          _
      $region24: #{tpu_custom_call.1} parent=5 // pred_fallthru
        _
      %p279 = scmp.le.s32.totalorder 1, %s24
      %p280 = scmp.lt.s32.totalorder %s24, 5
      %p281 = pnand %p279, %p280
      %p282 = pneg %p281
      // Predicated region
      $region33: #{tpu_custom_call.1} parent=5 // pred_check
        _
      $region34: #{tpu_custom_call.1} parent=5 // pred_check_branch
        %284 = sbr.rel (%p281) target = $region36
      $region35: #{tpu_custom_call.1} parent=5 // pred_region
        %s285 = ssub.s32 %s24, 1
        %s286 = sand.u32 %s51, 1
        %s287 = scalar_lea.sflag [#allocation3], %s286
        %s288 = sand.u32 %s51, 1
        %s289 = smul.addr %s288, 8
        %s290 = scalar_lea.vmem [#allocation2], %s289
        // Predicated region
        $region37: #{tpu_custom_call.1} parent=35 // pred_check
          %p291 = pneg %p64
        $region38: #{tpu_custom_call.1} parent=35 // pred_check_branch
          %293 = sbr.rel (%p291) target = $region40
        $region39: #{tpu_custom_call.1} parent=35 // pred_region
          %294 = dma.done %s287, 128
        $region40: #{tpu_custom_call.1} parent=35 // pred_fallthru
          _
        %s295 = sand.u32 %s29, 1
        %s296 = scalar_lea.sflag [#allocation6], %s295
        %s297 = sand.u32 %s79, 1
        %s298 = smul.addr %s297, 8
        %s299 = scalar_lea.vmem [#allocation5], %s298
        // Predicated region
        $region41: #{tpu_custom_call.1} parent=35 // pred_check
          %p300 = pneg %p92
        $region42: #{tpu_custom_call.1} parent=35 // pred_check_branch
          %302 = sbr.rel (%p300) target = $region44
        $region43: #{tpu_custom_call.1} parent=35 // pred_region
          %303 = dma.done %s296, 128
        $region44: #{tpu_custom_call.1} parent=35 // pred_fallthru
          _
        // Predicated region
        $region45: #{tpu_custom_call.1} parent=35 // pred_check
          %p304 = pneg %p113
        $region46: #{tpu_custom_call.1} parent=35 // pred_check_branch
          %306 = sbr.rel (%p304) target = $region48
        $region47: #{tpu_custom_call.1} parent=35 // pred_region
          %307 = dma.done [#allocation6], 1024
        $region48: #{tpu_custom_call.1} parent=35 // pred_fallthru
          _
        %s308 = sand.u32 %s51, 1
        %s309 = scalar_lea.sflag [#allocation3], %s308
        %s310 = sand.u32 %s51, 1
        %s311 = smul.addr %s310, 8
        %s312 = scalar_lea.vmem [#allocation2], %s311
        %p313 = pneg %p64
        %p314 = pneg %p61
        %s315 = sand.u32 %s29, 1
        %s316 = scalar_lea.sflag [#allocation6], %s315
        %s317 = sand.u32 %s79, 1
        %s318 = smul.addr %s317, 8
        %s319 = scalar_lea.vmem [#allocation5], %s318
        %p320 = pneg %p92
        %p321 = pneg %p89
        %p322 = pneg %p113
        %p323 = pneg %p110
        %p324 = pneg %p134
        %p325 = pneg %p131
        %p326 = pneg %p160
        %p327 = pneg %p157
        %s328 = sand.u32 %s147, 1
        %s329 = scalar_lea.sflag [#allocation4], %s328
        %s330 = sand.u32 %s147, 1
        %s331 = scalar_lea.vmem [#allocation8], %s330
        %p332 = pneg %p186
        %p333 = pneg %p183
        %s334 = sand.u32 %s173, 1
        %s335 = scalar_lea.sflag [#allocation10], %s334
        %s336 = sand.u32 %s173, 1
        %s337 = scalar_lea.vmem [#allocation9], %s336
        %s338 = smul.u32 2, %s34
        %s339 = ssub.s32 3, %s338
        %p340 = scmp.lt.s32.totalorder %s339, 2
        %s341 = scalar_select %p340, %s339, 2
        %s342 = smul.u32 64, %s341
        %s343 = smul.u32 2, %s34
        %s344 = ssub.s32 3, %s343
        %p345 = scmp.lt.s32.totalorder %s344, 2
        %s346 = scalar_select %p345, %s344, 2
        %s347 = smul.u32 64, %s346
        %p349 = scmp.eq.s32.totalorder %s34, 0
        // Predicated region
        $region49: #{tpu_custom_call.1} parent=35 // pred_check
          %p350 = pneg %p349
        $region50: #{tpu_custom_call.1} parent=35 // pred_check_branch
          %352 = sbr.rel (%p350) target = $region52
        $region51: #{tpu_custom_call.1} parent=35 // pred_region
          %353 = vst [vmem:[%s331] sm:$0x1] 0.0
          %354 = vst [vmem:[%s337] sm:$0x1] 0.0
        $region52: #{tpu_custom_call.1} parent=35 // pred_fallthru
          _
        %v355 = vld [vmem:[%s290] sm:$0xf]
        %v356 = vld [vmem:[%s290 + $0x4] sm:$0xf]
        %v357 = vld [vmem:[%s299] sm:$0xf]
        %v358 = vld [vmem:[%s299 + $0x4] sm:$0xf]
        %v359 = vunpack.c.l.bf16 %v357
        %v360 = vunpack.c.l.bf16 %v358
        %v361 = vunpack.c.l.bf16 %v355
        %v362 = vunpack.c.l.bf16 %v356
        %p363 = scmp.lt.s32.totalorder %s34, 1
        // Predicated region
        $region53: #{tpu_custom_call.1} parent=35 // pred_check
          %p364 = pneg %p363
        $region54: #{tpu_custom_call.1} parent=35 // pred_check_branch
          %366 = sbr.rel (%p364) target = $region56
        $region55: #{tpu_custom_call.1} parent=35 // pred_region
          %367 = vmax.xlane.f32.xlu0 %v359
          %v368 = vpop.xlane.xlu0 %367
          %369 = vmax.xlane.f32.xlu0 %v360
          %v370 = vpop.xlane.xlu0 %369
          %v371 = vsub.f32 %v359, %v368
          %v372 = vsub.f32 %v360, %v370
          %v373 = vmul.f32 %v371, 1.442695
          %v374 = vpow.pop %v373
          %v375 = vmul.f32 %v372, 1.442695
          %v376 = vpow.pop %v375
          %377 = vadd.xlane.f32.xlu0 %v374
          %v378 = vpop.xlane.xlu0 %377
          %379 = vadd.xlane.f32.xlu0 %v376
          %v380 = vpop.xlane.xlu0 %379
          %v381 = vrcp.pop %v378
          %v382 = vrcp.pop %v380
          %v383 = vmul.f32 %v374, %v381
          %v384 = vmul.f32 %v376, %v382
          %vm385 = vcmp.eq.f32.partialorder %v359, %v368
          %vm386 = vcmp.eq.f32.partialorder %v360, %v370
          %v387 = vsel %vm385, 1, 0
          %v388 = vsel %vm386, 1, 0
          %v389 = vcvt.s32.f32 %v387
          %v390 = vcvt.s32.f32 %v388
          %v391 = vld [vmem:[#allocation7] sm:$0xf]
          %v392 = vld [vmem:[#allocation7 + $0x4] sm:$0xf]
          %v393 = vld [vmem:[#allocation7 + $0x8] sm:$0xf]
          %v394 = vld [vmem:[#allocation7 + $0xc] sm:$0xf]
          %v395 = vld [vmem:[#allocation7 + $0x10] sm:$0xf]
          %v396 = vld [vmem:[#allocation7 + $0x14] sm:$0xf]
          %v397 = vld [vmem:[#allocation7 + $0x18] sm:$0xf]
          %v398 = vld [vmem:[#allocation7 + $0x1c] sm:$0xf]
          %v399 = vld [vmem:[#allocation7 + $0x20] sm:$0xf]
          %v400 = vld [vmem:[#allocation7 + $0x24] sm:$0xf]
          %v401 = vld [vmem:[#allocation7 + $0x28] sm:$0xf]
          %v402 = vld [vmem:[#allocation7 + $0x2c] sm:$0xf]
          %v403 = vld [vmem:[#allocation7 + $0x30] sm:$0xf]
          %v404 = vld [vmem:[#allocation7 + $0x34] sm:$0xf]
          %v405 = vld [vmem:[#allocation7 + $0x38] sm:$0xf]
          %v406 = vld [vmem:[#allocation7 + $0x3c] sm:$0xf]
          %v409 = vunpack.c.l.b16 %v355
          %v410 = vunpack.c.l.b16 %v356
          %v411 = vpack.c.b16 %v410, %v409
          %v429 = vunpack.c.l.b16 %v391
          %v430 = vunpack.c.l.b16 %v392
          %v431 = vunpack.c.l.b16 %v393
          %v432 = vunpack.c.l.b16 %v394
          %v433 = vunpack.c.l.b16 %v395
          %v434 = vunpack.c.l.b16 %v396
          %v435 = vunpack.c.l.b16 %v397
          %v436 = vunpack.c.l.b16 %v398
          %v437 = vunpack.c.l.b16 %v399
          %v438 = vunpack.c.l.b16 %v400
          %v439 = vunpack.c.l.b16 %v401
          %v440 = vunpack.c.l.b16 %v402
          %v441 = vunpack.c.l.b16 %v403
          %v442 = vunpack.c.l.b16 %v404
          %v443 = vunpack.c.l.b16 %v405
          %v444 = vunpack.c.l.b16 %v406
          %v445 = vpack.c.b16 %v430, %v429
          %v446 = vpack.c.b16 %v432, %v431
          %v447 = vpack.c.b16 %v434, %v433
          %v448 = vpack.c.b16 %v436, %v435
          %v449 = vpack.c.b16 %v438, %v437
          %v450 = vpack.c.b16 %v440, %v439
          %v451 = vpack.c.b16 %v442, %v441
          %v452 = vpack.c.b16 %v444, %v443
          %461 = vmatprep.subr.bf16.mxu0 0
          %462 = vmatpush1.bf16.msra.mxu0 %v445
          %463 = vmatprep.subr.bf16.mxu0 0
          %464 = vmatpush1.bf16.msra.mxu0 %v446
          %465 = vmatprep.subr.bf16.mxu0 0
          %466 = vmatpush1.bf16.msra.mxu0 %v447
          %467 = vmatprep.subr.bf16.mxu0 0
          %468 = vmatpush1.bf16.msra.mxu0 %v448
          %469 = vmatprep.subr.bf16.mxu0 0
          %470 = vmatpush1.bf16.msra.mxu0 %v449
          %471 = vmatprep.subr.bf16.mxu0 0
          %472 = vmatpush1.bf16.msra.mxu0 %v450
          %473 = vmatprep.subr.bf16.mxu0 0
          %474 = vmatpush1.bf16.msra.mxu0 %v451
          %475 = vmatprep.subr.bf16.mxu0 0
          %476 = vmatpush1.bf16.msra.mxu0 %v452
          %477 = vmatprep.subr.bf16.mxu0 0
          %478 = vmatpush1.bf16.msra.mxu0 0
          %479 = vmatprep.subr.bf16.mxu0 0
          %480 = vmatpush1.bf16.msra.mxu0 0
          %481 = vmatprep.subr.bf16.mxu0 0
          %482 = vmatpush1.bf16.msra.mxu0 0
          %483 = vmatprep.subr.bf16.mxu0 0
          %484 = vmatpush1.bf16.msra.mxu0 0
          %485 = vmatprep.subr.bf16.mxu0 0
          %486 = vmatpush1.bf16.msra.mxu0 0
          %487 = vmatprep.subr.bf16.mxu0 0
          %488 = vmatpush1.bf16.msra.mxu0 0
          %489 = vmatprep.subr.bf16.mxu0 0
          %490 = vmatpush1.bf16.msra.mxu0 0
          %491 = vmatprep.subr.bf16.mxu0 0
          %492 = vmatpush1.bf16.msra.mxu0 0
          %493 = vmatprep.mubr.bf16.mxu0 0
          %494 = vmatmul.mubr.bf16.gmra.mrb[0].mxu0 %v411
          %v495 = vpop.f32.mrb[0].mxu0
          %v496 = vadd.f32 0.0, %v495
          %v497 = vpop.f32.mrb[0].mxu0
          %v498 = vpop.f32.mrb[0].mxu0
          %v499 = vadd.f32 0.0, %v498
          %v500 = vpop.f32.mrb[0].mxu0
          %501 = vdwg.mxu0
          %v502 = vmul.f32 %v361, %v361
          %v503 = vmul.f32 %v362, %v362
          %504 = vadd.xlane.f32.xlu0 %v502
          %v505 = vpop.xlane.xlu0 %504
          %506 = vadd.xlane.f32.xlu0 %v503
          %v507 = vpop.xlane.xlu0 %506
          %v508 = vld [vmem:[%s3] sm:$0x1]
          %v509 = vmul.f32 %v496, 2.0
          %v510 = vmul.f32 %v499, 2.0
          %v512 = vlaneseq
          %v513 = vshrl.u32 %v512, 7
          %v514 = vsub.s32 0, %v513
          %v515 = vrot.slane %v508, %v514
          %v517 = vsub.f32 %v515, %v509
          %v518 = vsub.f32 %v515, %v510
          %v519 = vmul.f32 %v517, %v389
          %v520 = vmul.f32 %v518, %v390
          %521 = vadd.xlane.f32.xlu0 %v519
          %v522 = vpop.xlane.xlu0 %521
          %523 = vadd.xlane.f32.xlu0 %v520
          %v524 = vpop.xlane.xlu0 %523
          %v525 = vadd.f32 %v505, %v522
          %v526 = vadd.f32 %v507, %v524
          %v527 = vmax.f32 %v525, 1e-12
          %v528 = vmax.f32 %v526, 1e-12
          %v529 = vmin.f32 %v527, 1e+12
          %v530 = vmin.f32 %v528, 1e+12
          %v531 = vld [vmem:[%s337] sm:$0x1]
          %v532 = vadd.f32 %v383, %v384
          %v533 = vrot.slane %v532, 4
          %v534 = vadd.f32 %v532, %v533
          %v535 = vrot.slane %v534, 2
          %v536 = vadd.f32 %v534, %v535
          %v537 = vrot.slane %v536, 1
          %v538 = vadd.f32 %v536, %v537
          %v539 = vadd.f32 %v531, %v538
          %540 = vst [vmem:[%s337] sm:$0x1] %v539
          %v541 = vld [vmem:[%s331] sm:$0x1]
          %vm542 = vcmask 7168
          %v543 = vsel %vm542, %v529, 0.0
          %v544 = vsel %vm542, %v530, 0.0
          %v545 = vadd.f32 %v543, %v544
          %546 = vadd.xlane.f32.xlu0 %v545
          %v547 = vpop.xlane.xlu0 %546
          %v548 = vrot.slane %v547, 4
          %v549 = vadd.f32 %v547, %v548
          %v550 = vrot.slane %v549, 2
          %v551 = vadd.f32 %v549, %v550
          %v552 = vrot.slane %v551, 1
          %v553 = vadd.f32 %v551, %v552
          %s554 = vtos %v553
          %v555 = vstv %s554
          %v556 = vadd.f32 %v541, %v555
          %557 = vst [vmem:[%s331] sm:$0x1] %v556
        $region56: #{tpu_custom_call.1} parent=35 // pred_fallthru
          _
        %p558 = scmp.eq.s32.totalorder %s34, 1
        // Predicated region
        $region57: #{tpu_custom_call.1} parent=35 // pred_check
          %p559 = pneg %p558
        $region58: #{tpu_custom_call.1} parent=35 // pred_check_branch
          %561 = sbr.rel (%p559) target = $region60
        $region59: #{tpu_custom_call.1} parent=35 // pred_region
          %v562 = vlaneseq
          %v563 = vshrl.u32 %v562, 7
          %v564 = vadd.s32 %v563, 8
          %vm565 = vcmp.lt.s32.totalorder %v563, 8
          %vm566 = vcmp.lt.s32.totalorder %v564, 8
          %567 = vmax.xlane.f32.xlu0 %v359
          %v568 = vpop.xlane.xlu0 %567
          %569 = vmax.xlane.f32.xlu0 %v360
          %v570 = vpop.xlane.xlu0 %569
          %v571 = vsub.f32 %v359, %v568
          %v572 = vsub.f32 %v360, %v570
          %v573 = vmul.f32 %v571, 1.442695
          %v574 = vpow.pop %v573
          %v575 = vmul.f32 %v572, 1.442695
          %v576 = vpow.pop %v575
          %577 = vadd.xlane.f32.xlu0 %v574
          %v578 = vpop.xlane.xlu0 %577
          %579 = vadd.xlane.f32.xlu0 %v576
          %v580 = vpop.xlane.xlu0 %579
          %v581 = vrcp.pop %v578
          %v582 = vrcp.pop %v580
          %v583 = vmul.f32 %v574, %v581
          %v584 = vmul.f32 %v576, %v582
          %vm585 = vcmp.eq.f32.partialorder %v359, %v568
          %vm586 = vcmp.eq.f32.partialorder %v360, %v570
          %v587 = vsel %vm585, 1, 0
          %v588 = vsel %vm586, 1, 0
          %v589 = vcvt.s32.f32 %v587
          %v590 = vcvt.s32.f32 %v588
          %v591 = vld [vmem:[#allocation7] sm:$0xf]
          %v592 = vld [vmem:[#allocation7 + $0x4] sm:$0xf]
          %v593 = vld [vmem:[#allocation7 + $0x8] sm:$0xf]
          %v594 = vld [vmem:[#allocation7 + $0xc] sm:$0xf]
          %v595 = vld [vmem:[#allocation7 + $0x10] sm:$0xf]
          %v596 = vld [vmem:[#allocation7 + $0x14] sm:$0xf]
          %v597 = vld [vmem:[#allocation7 + $0x18] sm:$0xf]
          %v598 = vld [vmem:[#allocation7 + $0x1c] sm:$0xf]
          %v599 = vld [vmem:[#allocation7 + $0x20] sm:$0xf]
          %v600 = vld [vmem:[#allocation7 + $0x24] sm:$0xf]
          %v601 = vld [vmem:[#allocation7 + $0x28] sm:$0xf]
          %v602 = vld [vmem:[#allocation7 + $0x2c] sm:$0xf]
          %v603 = vld [vmem:[#allocation7 + $0x30] sm:$0xf]
          %v604 = vld [vmem:[#allocation7 + $0x34] sm:$0xf]
          %v605 = vld [vmem:[#allocation7 + $0x38] sm:$0xf]
          %v606 = vld [vmem:[#allocation7 + $0x3c] sm:$0xf]
          %v609 = vunpack.c.l.b16 %v355
          %v610 = vunpack.c.l.b16 %v356
          %v611 = vpack.c.b16 %v610, %v609
          %v629 = vunpack.c.l.b16 %v591
          %v630 = vunpack.c.l.b16 %v592
          %v631 = vunpack.c.l.b16 %v593
          %v632 = vunpack.c.l.b16 %v594
          %v633 = vunpack.c.l.b16 %v595
          %v634 = vunpack.c.l.b16 %v596
          %v635 = vunpack.c.l.b16 %v597
          %v636 = vunpack.c.l.b16 %v598
          %v637 = vunpack.c.l.b16 %v599
          %v638 = vunpack.c.l.b16 %v600
          %v639 = vunpack.c.l.b16 %v601
          %v640 = vunpack.c.l.b16 %v602
          %v641 = vunpack.c.l.b16 %v603
          %v642 = vunpack.c.l.b16 %v604
          %v643 = vunpack.c.l.b16 %v605
          %v644 = vunpack.c.l.b16 %v606
          %v645 = vpack.c.b16 %v630, %v629
          %v646 = vpack.c.b16 %v632, %v631
          %v647 = vpack.c.b16 %v634, %v633
          %v648 = vpack.c.b16 %v636, %v635
          %v649 = vpack.c.b16 %v638, %v637
          %v650 = vpack.c.b16 %v640, %v639
          %v651 = vpack.c.b16 %v642, %v641
          %v652 = vpack.c.b16 %v644, %v643
          %661 = vmatprep.subr.bf16.mxu0 0
          %662 = vmatpush1.bf16.msra.mxu0 %v645
          %663 = vmatprep.subr.bf16.mxu0 0
          %664 = vmatpush1.bf16.msra.mxu0 %v646
          %665 = vmatprep.subr.bf16.mxu0 0
          %666 = vmatpush1.bf16.msra.mxu0 %v647
          %667 = vmatprep.subr.bf16.mxu0 0
          %668 = vmatpush1.bf16.msra.mxu0 %v648
          %669 = vmatprep.subr.bf16.mxu0 0
          %670 = vmatpush1.bf16.msra.mxu0 %v649
          %671 = vmatprep.subr.bf16.mxu0 0
          %672 = vmatpush1.bf16.msra.mxu0 %v650
          %673 = vmatprep.subr.bf16.mxu0 0
          %674 = vmatpush1.bf16.msra.mxu0 %v651
          %675 = vmatprep.subr.bf16.mxu0 0
          %676 = vmatpush1.bf16.msra.mxu0 %v652
          %677 = vmatprep.subr.bf16.mxu0 0
          %678 = vmatpush1.bf16.msra.mxu0 0
          %679 = vmatprep.subr.bf16.mxu0 0
          %680 = vmatpush1.bf16.msra.mxu0 0
          %681 = vmatprep.subr.bf16.mxu0 0
          %682 = vmatpush1.bf16.msra.mxu0 0
          %683 = vmatprep.subr.bf16.mxu0 0
          %684 = vmatpush1.bf16.msra.mxu0 0
          %685 = vmatprep.subr.bf16.mxu0 0
          %686 = vmatpush1.bf16.msra.mxu0 0
          %687 = vmatprep.subr.bf16.mxu0 0
          %688 = vmatpush1.bf16.msra.mxu0 0
          %689 = vmatprep.subr.bf16.mxu0 0
          %690 = vmatpush1.bf16.msra.mxu0 0
          %691 = vmatprep.subr.bf16.mxu0 0
          %692 = vmatpush1.bf16.msra.mxu0 0
          %693 = vmatprep.mubr.bf16.mxu0 0
          %694 = vmatmul.mubr.bf16.gmra.mrb[0].mxu0 %v611
          %v695 = vpop.f32.mrb[0].mxu0
          %v696 = vadd.f32 0.0, %v695
          %v697 = vpop.f32.mrb[0].mxu0
          %v698 = vpop.f32.mrb[0].mxu0
          %v699 = vadd.f32 0.0, %v698
          %v700 = vpop.f32.mrb[0].mxu0
          %701 = vdwg.mxu0
          %v702 = vmul.f32 %v361, %v361
          %v703 = vmul.f32 %v362, %v362
          %704 = vadd.xlane.f32.xlu0 %v702
          %v705 = vpop.xlane.xlu0 %704
          %706 = vadd.xlane.f32.xlu0 %v703
          %v707 = vpop.xlane.xlu0 %706
          %v708 = vld [vmem:[%s3] sm:$0x1]
          %v709 = vmul.f32 %v696, 2.0
          %v710 = vmul.f32 %v699, 2.0
          %v712 = vlaneseq
          %v713 = vshrl.u32 %v712, 7
          %v714 = vsub.s32 0, %v713
          %v715 = vrot.slane %v708, %v714
          %v717 = vsub.f32 %v715, %v709
          %v718 = vsub.f32 %v715, %v710
          %v719 = vmul.f32 %v717, %v589
          %v720 = vmul.f32 %v718, %v590
          %721 = vadd.xlane.f32.xlu0 %v719
          %v722 = vpop.xlane.xlu0 %721
          %723 = vadd.xlane.f32.xlu0 %v720
          %v724 = vpop.xlane.xlu0 %723
          %v725 = vadd.f32 %v705, %v722
          %v726 = vadd.f32 %v707, %v724
          %v727 = vmax.f32 %v725, 1e-12
          %v728 = vmax.f32 %v726, 1e-12
          %v729 = vmin.f32 %v727, 1e+12
          %v730 = vmin.f32 %v728, 1e+12
          %v731 = vsel %vm565, 1, 0
          %v732 = vsel %vm566, 1, 0
          %vm733 = vcmp.eq.s32.totalorder %v731, 1
          %vm734 = vcmp.eq.s32.totalorder %v732, 1
          %v735 = vsel %vm733, %v583, 0.0
          %v736 = vsel %vm734, %v584, 0.0
          %v737 = vsel %vm565, %v729, 0.0
          %v738 = vsel %vm566, %v730, 0.0
          %v739 = vld [vmem:[%s337] sm:$0x1]
          %v740 = vadd.f32 %v735, %v736
          %v741 = vrot.slane %v740, 4
          %v742 = vadd.f32 %v740, %v741
          %v743 = vrot.slane %v742, 2
          %v744 = vadd.f32 %v742, %v743
          %v745 = vrot.slane %v744, 1
          %v746 = vadd.f32 %v744, %v745
          %v747 = vadd.f32 %v739, %v746
          %748 = vst [vmem:[%s337] sm:$0x1] %v747
          %v749 = vld [vmem:[%s331] sm:$0x1]
          %vm750 = vcmask 7168
          %v751 = vsel %vm750, %v737, 0.0
          %v752 = vsel %vm750, %v738, 0.0
          %v753 = vadd.f32 %v751, %v752
          %754 = vadd.xlane.f32.xlu0 %v753
          %v755 = vpop.xlane.xlu0 %754
          %v756 = vrot.slane %v755, 4
          %v757 = vadd.f32 %v755, %v756
          %v758 = vrot.slane %v757, 2
          %v759 = vadd.f32 %v757, %v758
          %v760 = vrot.slane %v759, 1
          %v761 = vadd.f32 %v759, %v760
          %s762 = vtos %v761
          %v763 = vstv %s762
          %v764 = vadd.f32 %v749, %v763
          %765 = vst [vmem:[%s331] sm:$0x1] %v764
        $region60: #{tpu_custom_call.1} parent=35 // pred_fallthru
          _
        %s766 = sand.u32 %s147, 1
        %s767 = scalar_lea.sflag [#allocation4], %s766
        %s768 = sand.u32 %s147, 1
        %s769 = scalar_lea.vmem [#allocation8], %s768
        %s770 = sand.u32 %s173, 1
        %s771 = scalar_lea.sflag [#allocation10], %s770
        %s772 = sand.u32 %s173, 1
        %s773 = scalar_lea.vmem [#allocation9], %s772
        // Predicated region
        $region61: #{tpu_custom_call.1} parent=35 // pred_check
          %p774 = pneg %p157
        $region62: #{tpu_custom_call.1} parent=35 // pred_check_branch
          %776 = sbr.rel (%p774) target = $region64
        $region63: #{tpu_custom_call.1} parent=35 // pred_region
          %s778 = ssub.s32 16, 16
          %779 = vsyncadd %s767, %s778
          %s780 = smul.addr %s33, 16
          %s781 = scalar_lea.hbm %s4, %s780
          %s783 = sshll.u32 %s769, 4
          %s784 = int_to_ptr.vmem [resolvable:$true] %s783
          %786 = dma.vmem_to_hbm [thread:$0]  %s784, 16, %s781, %s767
        $region64: #{tpu_custom_call.1} parent=35 // pred_fallthru
          _
        // Predicated region
        $region65: #{tpu_custom_call.1} parent=35 // pred_check
          %p787 = pneg %p183
        $region66: #{tpu_custom_call.1} parent=35 // pred_check_branch
          %789 = sbr.rel (%p787) target = $region68
        $region67: #{tpu_custom_call.1} parent=35 // pred_region
          %s791 = ssub.s32 16, 16
          %792 = vsyncadd %s771, %s791
          %s793 = smul.addr %s33, 16
          %s794 = scalar_lea.hbm %s5, %s793
          %s796 = sshll.u32 %s773, 4
          %s797 = int_to_ptr.vmem [resolvable:$true] %s796
          %799 = dma.vmem_to_hbm [thread:$0]  %s797, 16, %s794, %s771
        $region68: #{tpu_custom_call.1} parent=35 // pred_fallthru
          _
      $region36: #{tpu_custom_call.1} parent=5 // pred_fallthru
        _
      %p800 = scmp.le.s32.totalorder 2, %s24
      // Predicated region
      $region69: #{tpu_custom_call.1} parent=5 // pred_check
        %p801 = pneg %p800
      $region70: #{tpu_custom_call.1} parent=5 // pred_check_branch
        %803 = sbr.rel (%p801) target = $region72
      $region71: #{tpu_custom_call.1} parent=5 // pred_region
        %s804 = ssub.s32 %s24, 2
        // Predicated region
        $region73: #{tpu_custom_call.1} parent=71 // pred_check
          %p805 = pneg %p163
        $region74: #{tpu_custom_call.1} parent=71 // pred_check_branch
          %807 = sbr.rel (%p805) target = $region76
        $region75: #{tpu_custom_call.1} parent=71 // pred_region
          %s808 = sand.u32 %s148, 1
          %s809 = scalar_lea.sflag [#allocation4], %s808
          %s810 = sand.u32 %s148, 1
          %s811 = scalar_lea.vmem [#allocation8], %s810
          %812 = dma.done %s809, 16
        $region76: #{tpu_custom_call.1} parent=71 // pred_fallthru
          _
        // Predicated region
        $region77: #{tpu_custom_call.1} parent=71 // pred_check
          %p813 = pneg %p189
        $region78: #{tpu_custom_call.1} parent=71 // pred_check_branch
          %815 = sbr.rel (%p813) target = $region80
        $region79: #{tpu_custom_call.1} parent=71 // pred_region
          %s816 = sand.u32 %s174, 1
          %s817 = scalar_lea.sflag [#allocation10], %s816
          %s818 = sand.u32 %s174, 1
          %s819 = scalar_lea.vmem [#allocation9], %s818
          %820 = dma.done %s817, 16
        $region80: #{tpu_custom_call.1} parent=71 // pred_fallthru
          _
      $region72: #{tpu_custom_call.1} parent=5 // pred_fallthru
        _
    $region6: #{tpu_custom_call.1} parent=1 // loop_footer
      %s28 = sadd.s32 1, %s24
    $region7: #{tpu_custom_call.1} parent=1 // loop_footer_branch
      %23 = sbr.rel target = $region3
    $region8: #{tpu_custom_call.1} parent=1 // loop_exit
      _
    %821 = vsyncpa [#allocation3], 1
    %s822 = scalar_lea.sflag [#allocation3], 1
    %823 = vsyncpa %s822, 1
    %824 = vsyncpa [#allocation6], 1
    %s825 = scalar_lea.sflag [#allocation6], 1
    %826 = vsyncpa %s825, 1
    %827 = vsyncpa [#allocation4], 1
    %s828 = scalar_lea.sflag [#allocation4], 1
    %829 = vsyncpa %s828, 1
    %830 = vsyncpa [#allocation10], 1
    %s831 = scalar_lea.sflag [#allocation10], 1
    %832 = vsyncpa %s831, 1

</llo_original>
